<compile_context>
chip_gen: v7x
topology: tpu7x:2x2x1
jax: 0.10.0
libtpu: 0.0.40
codegen_flags: <defaults>
</compile_context>

<pallas_src>
import jax
import jax.numpy as jnp
from jax.experimental import pallas as pl
from jax.experimental.pallas import tpu as pltpu


# ---------------------------------------------------------------------------
# Pallas kernels (one full-tile store each; cast happens in-vreg)
# ---------------------------------------------------------------------------
def _concat_kernel(t_ref, g_ref, o_ref):
    # output block = [target channels | origin channels], built in registers
    # and written with a single unmasked store.
    o_ref[...] = jnp.concatenate(
        [t_ref[...].astype(o_ref.dtype), g_ref[...].astype(o_ref.dtype)],
        axis=1)


def _concat_zeros_kernel(t_ref, o_ref):
    # origin_out is None -> second half of the channels is zeros; the zeros
    # are generated in VMEM/vregs, never materialized in HBM as an input.
    t = t_ref[...].astype(o_ref.dtype)
    pad = o_ref.shape[1] - t.shape[1]
    zeros = jnp.zeros((t.shape[0], pad, t.shape[2]), dtype=o_ref.dtype)
    o_ref[...] = jnp.concatenate([t, zeros], axis=1)


# ---------------------------------------------------------------------------
# Tiling helpers
# ---------------------------------------------------------------------------
def _vmem_budgets():
    """(output-block byte budget, vmem_limit_bytes) per TPU generation."""
    try:
        cap = pltpu.get_tpu_info().vmem_capacity_bytes
    except Exception:
        cap = 64 * 1024 * 1024  # be conservative (v7x-sized) if query fails
    if cap >= 96 * 1024 * 1024:          # v5e / v6e: 128 MiB VMEM
        return 6 * 1024 * 1024, 48 * 1024 * 1024
    return 4 * 1024 * 1024, 32 * 1024 * 1024   # v7x: 64 MiB per TensorCore


def _pick_spatial_tile(hw, c_out, itemsize, block_budget_bytes):
    """Largest multiple of 128 that divides hw and keeps one (1, c_out, tile)
    output block under the byte budget.  Caller guarantees hw % 128 == 0."""
    budget_elems = max(128, block_budget_bytes // max(1, c_out * itemsize))
    tile = max(128, min(hw, (budget_elems // 128) * 128))
    while tile > 128 and hw % tile != 0:
        tile -= 128
    return tile


# ---------------------------------------------------------------------------
# Wrapper
# ---------------------------------------------------------------------------
def dense_lateral_forward(origin_out, target_in):
    """Equivalent of DenseLateral.forward: cat((target_in, origin_out), dim=1).

    origin_out may be None (handled at trace time); the zero half is then
    produced inside the kernel.  Mixed dtypes promote like torch.cat."""
    n, c1, h, w = target_in.shape
    hw = h * w

    if origin_out is None:
        out_dtype = target_in.dtype
        c2 = c1
    else:
        nb, c2, hb, wb = origin_out.shape
        assert (nb, hb, wb) == (n, h, w), \
            "batch/spatial dims must match for channel concat"
        out_dtype = jnp.promote_types(target_in.dtype, origin_out.dtype)

    c_out = c1 + c2
    itemsize = jnp.dtype(out_dtype).itemsize
    out_bytes = n * c_out * hw * itemsize

    # Small-tensor / lane-unaligned fallback: XLA's native concat is at least
    # as fast, fusable with neighbors, and avoids masked partial stores.
    if hw < 128 or hw % 128 != 0 or out_bytes < 128 * 1024:
        t = target_in.astype(out_dtype)
        g = (jnp.zeros_like(t) if origin_out is None
             else origin_out.astype(out_dtype))
        return jnp.concatenate([t, g], axis=1)

    block_budget, vmem_limit = _vmem_budgets()
    tile = _pick_spatial_tile(hw, c_out, itemsize, block_budget)
    n_sp = hw // tile
    # Guarantee >= 2 parallel grid points where possible (v7x has 2 TCs).
    if n * n_sp < 2 and hw % 256 == 0:
        tile = hw // 2
        n_sp = 2

    grid = (n, n_sp)
    compiler_params = pltpu.CompilerParams(
        dimension_semantics=("parallel", "parallel"),
        vmem_limit_bytes=vmem_limit)
    out_shape = jax.ShapeDtypeStruct((n, c_out, hw), out_dtype)
    out_spec = pl.BlockSpec((1, c_out, tile), lambda b, s: (b, 0, s))

    if origin_out is None:
        out = pl.pallas_call(
            _concat_zeros_kernel,
            out_shape=out_shape,
            grid=grid,
            in_specs=[pl.BlockSpec((1, c1, tile), lambda b, s: (b, 0, s))],
            out_specs=out_spec,
            compiler_params=compiler_params,
        )(target_in.reshape(n, c1, hw))
    else:
        out = pl.pallas_call(
            _concat_kernel,
            out_shape=out_shape,
            grid=grid,
            in_specs=[pl.BlockSpec((1, c1, tile), lambda b, s: (b, 0, s)),
                      pl.BlockSpec((1, c2, tile), lambda b, s: (b, 0, s))],
            out_specs=out_spec,
            compiler_params=compiler_params,
        )(target_in.reshape(n, c1, hw),
          origin_out.reshape(n, c2, hw))   # no wrapper-side cast: cast in-kernel
    return out.reshape(n, c_out, h, w)


# ---------------------------------------------------------------------------
# Self-test
# ---------------------------------------------------------------------------
if __name__ == "__main__":
    key = jax.random.PRNGKey(0)
    k1, k2, k3, k4 = jax.random.split(key, 4)

    # --- Pallas path: lane-dense spatial, sublane-aligned channels ---------
    target_in = jax.random.normal(k1, (2, 8, 64, 64), dtype=jnp.float32)
    origin_out = jax.random.normal(k2, (2, 8, 64, 64), dtype=jnp.float32)

    fwd = jax.jit(dense_lateral_forward)
    out = fwd(origin_out, target_in)
    jax.block_until_ready(out)
    ref = jnp.concatenate([target_in, origin_out], axis=1)
    assert out.shape == (2, 16, 64, 64), out.shape
    assert out.dtype == ref.dtype
    assert bool(jnp.array_equal(out, ref))

    # --- origin_out is None -> concat with zeros (zeros generated in-kernel)
    out0 = jax.jit(lambda t: dense_lateral_forward(None, t))(target_in)
    jax.block_until_ready(out0)
    ref0 = jnp.concatenate([target_in, jnp.zeros_like(target_in)], axis=1)
    assert out0.shape == (2, 16, 64, 64), out0.shape
    assert bool(jnp.array_equal(out0, ref0))

    # --- mixed dtypes promote like torch.cat (cast happens inside kernel) --
    t_bf16 = jax.random.normal(k3, (2, 8, 64, 64), dtype=jnp.bfloat16)
    g_f32 = jax.random.normal(k4, (2, 8, 64, 64), dtype=jnp.float32)
    outm = jax.jit(dense_lateral_forward)(g_f32, t_bf16)
    jax.block_until_ready(outm)
    refm = jnp.concatenate([t_bf16.astype(jnp.float32), g_f32], axis=1)
    assert outm.dtype == jnp.float32
    assert bool(jnp.array_equal(outm, refm))

    # --- tiny / module-spec-sized shape goes through the XLA fallback ------
    t_small = jax.random.normal(k1, (2, 4, 16, 16), dtype=jnp.float32)
    g_small = jax.random.normal(k2, (2, 4, 16, 16), dtype=jnp.float32)
    outs = jax.jit(dense_lateral_forward)(g_small, t_small)
    jax.block_until_ready(outs)
    refs = jnp.concatenate([t_small, g_small], axis=1)
    assert outs.shape == (2, 8, 16, 16)
    assert bool(jnp.array_equal(outs, refs))

    print("KERNEL_OK")
</pallas_src>

<mosaic_0001>
module attributes {stable_mosaic.version = 11 : i64} {
  func.func @_concat_kernel(%arg0: i32, %arg1: i32, %arg2: memref<1x8x4096xf32, #tpu.memory_space<vmem>>, %arg3: memref<1x8x4096xf32, #tpu.memory_space<vmem>>, %arg4: memref<1x16x4096xf32, #tpu.memory_space<vmem>>) attributes {dimension_semantics = [#tpu.dimension_semantics<parallel>, #tpu.dimension_semantics<parallel>], iteration_bounds = array<i64: 2, 1>, scalar_prefetch = 0 : i64, scratch_operands = 0 : i64, tpu.core_type = #tpu.core_type<tc>, window_params = [{transform_indices = @transform_0, window_bounds = array<i64: 1, 8, 4096>}, {transform_indices = @transform_1, window_bounds = array<i64: 1, 8, 4096>}, {transform_indices = @transform_2, window_bounds = array<i64: 1, 16, 4096>}]} {
    %c0 = arith.constant 0 : index
    %c0_0 = arith.constant 0 : index
    %c0_1 = arith.constant 0 : index
    %0 = vector.load %arg2[%c0, %c0_0, %c0_1] : memref<1x8x4096xf32, #tpu.memory_space<vmem>>, vector<1x8x4096xf32>
    %c0_2 = arith.constant 0 : index
    %c0_3 = arith.constant 0 : index
    %c0_4 = arith.constant 0 : index
    %1 = vector.load %arg3[%c0_2, %c0_3, %c0_4] : memref<1x8x4096xf32, #tpu.memory_space<vmem>>, vector<1x8x4096xf32>
    %2 = tpu.concatenate %0, %1 in 1 : vector<1x8x4096xf32>, vector<1x8x4096xf32> -> vector<1x16x4096xf32>
    %c0_5 = arith.constant 0 : index
    %c0_6 = arith.constant 0 : index
    %c0_7 = arith.constant 0 : index
    %3 = vector.load %arg4[%c0_5, %c0_6, %c0_7] : memref<1x16x4096xf32, #tpu.memory_space<vmem>>, vector<1x16x4096xf32>
    tpu.vector_store %arg4[%c0_5, %c0_6, %c0_7], %2 {strides = array<i32>} : memref<1x16x4096xf32, #tpu.memory_space<vmem>>, vector<1x16x4096xf32>,
    return
  }
  func.func @transform_0(%arg0: i32, %arg1: i32) -> (i32, i32, i32) {
    %c0_i32 = arith.constant 0 : i32
    %c0_i32_0 = arith.constant 0 : i32
    return %arg0, %c0_i32, %arg1 : i32, i32, i32
  }
  func.func @transform_1(%arg0: i32, %arg1: i32) -> (i32, i32, i32) {
    %c0_i32 = arith.constant 0 : i32
    %c0_i32_0 = arith.constant 0 : i32
    return %arg0, %c0_i32, %arg1 : i32, i32, i32
  }
  func.func @transform_2(%arg0: i32, %arg1: i32) -> (i32, i32, i32) {
    %c0_i32 = arith.constant 0 : i32
    %c0_i32_0 = arith.constant 0 : i32
    return %arg0, %c0_i32, %arg1 : i32, i32, i32
  }
}

</mosaic_0001>

<llo_original>
// kernel: dense_lateral_forward.1
$region0: #{dense_lateral_forward.1}
  #allocation0 [shape = 'u32[]', space=smem, size = 0x4, offset = 0x4, fixed_abs, tag = 'smem constant byte address 0x4 - core index']
  #allocation1 [shape = 'u32[144,128]{1,0:T(1,128)}', space=vmem, size = 0x12000, scoped, tag = 'internal scratch']
  %s0 = inlined_call_operand.vmem [shape: f32[2,8,4096], index: 0, kind: input, shape index: {}]
  %s1 = inlined_call_operand.vmem [shape: f32[2,8,4096], index: 1, kind: input, shape index: {}]
  %s2 = inlined_call_operand.vmem [shape: f32[2,16,4096], index: 2, kind: output, shape index: {}]
  %s3 = sld [smem:[#allocation0]]
  $region41: #{dense_lateral_forward.1} parent=0
    _
  %s5 = ssub.s32 1, %s3
  %s6 = scalar_select 0, %s5, %s3
  loop: start=0, step=1, limit=4
  $region2: #{dense_lateral_forward.1} parent=0 // loop_pre_header
    _
  $region3: #{dense_lateral_forward.1} parent=0 // loop_header
    %s8 = sphi 0, %s12
    %p9 = scmp.ge.s32.totalorder %s8, 4
    %s15 = sphi 0, %s27
    %s16 = sphi 0, %s23
    %s17 = sphi 0, %s15
    %s18 = sphi 0, %s16
    %s19 = sphi 0, %s17
    %s20 = sphi 0, %s18
    %s32 = sphi 0, %s34
    %s35 = sphi 0, %s32
    %s36 = sphi 0, %s35
    %s52 = sphi 0, %s36
    %s60 = sphi 0, %s62
    %s63 = sphi 0, %s60
    %s64 = sphi 0, %s63
    %s80 = sphi 0, %s64
    %s88 = sphi 0, %s90
    %s91 = sphi 0, %s88
    %s92 = sphi 0, %s91
    %s108 = sphi 0, %s92
  $region4: #{dense_lateral_forward.1} parent=0 // loop_header_branch
    %11 = sbr.rel (%p9) target = $region8
  $region5: #{dense_lateral_forward.1} parent=0 // loop_body
    %s13 = ssub.s32 %s8, 1
    %s14 = ssub.s32 %s8, 2
    %s21 = sadd.s32 1, %s16
    %p22 = scmp.ge.s32.totalorder %s21, 1
    %s23 = scalar_select %p22, 0, %s21
    %s24 = sadd.s32 1, %s15
    %s25 = scalar_select %p22, %s24, %s15
    %p26 = scmp.ge.s32.totalorder %s25, 2
    %s27 = scalar_select %p26, 0, %s25
    %s28 = ssub.s32 %s15, %s27
    %s29 = ssub.s32 %s16, %s23
    %s30 = sor.u32 %s28, %s29
    %p31 = scmp.eq.s32.totalorder %s30, 0
    %s33 = sadd.s32 %s32, 1
    %s34 = scalar_select %p31, %s32, %s33
    %p37 = pneg %p31
    %p38 = scmp.eq.s32.totalorder %s8, 1
    %p39 = por %p37, %p38
    %p40 = scmp.ne.s32.totalorder %s32, %s35
    %p41 = scmp.eq.s32.totalorder %s8, 0
    %p42 = por %p40, %p41
    %p43 = scmp.ne.s32.totalorder %s32, %s35
    %p44 = scmp.eq.s32.totalorder %s13, 1
    %p45 = por %p43, %p44
    %p46 = scmp.ne.s32.totalorder %s35, %s36
    %p47 = scmp.eq.s32.totalorder %s13, 0
    %p48 = por %p46, %p47
    %p49 = scmp.ne.s32.totalorder %s35, %s36
    %p50 = scmp.eq.s32.totalorder %s14, 1
    %p51 = por %p49, %p50
    %p53 = scmp.ne.s32.totalorder %s36, %s52
    %p54 = scmp.eq.s32.totalorder %s14, 0
    %p55 = por %p53, %p54
    %s56 = ssub.s32 %s15, %s27
    %s57 = ssub.s32 %s16, %s23
    %s58 = sor.u32 %s56, %s57
    %p59 = scmp.eq.s32.totalorder %s58, 0
    %s61 = sadd.s32 %s60, 1
    %s62 = scalar_select %p59, %s60, %s61
    %p65 = pneg %p59
    %p66 = scmp.eq.s32.totalorder %s8, 1
    %p67 = por %p65, %p66
    %p68 = scmp.ne.s32.totalorder %s60, %s63
    %p69 = scmp.eq.s32.totalorder %s8, 0
    %p70 = por %p68, %p69
    %p71 = scmp.ne.s32.totalorder %s60, %s63
    %p72 = scmp.eq.s32.totalorder %s13, 1
    %p73 = por %p71, %p72
    %p74 = scmp.ne.s32.totalorder %s63, %s64
    %p75 = scmp.eq.s32.totalorder %s13, 0
    %p76 = por %p74, %p75
    %p77 = scmp.ne.s32.totalorder %s63, %s64
    %p78 = scmp.eq.s32.totalorder %s14, 1
    %p79 = por %p77, %p78
    %p81 = scmp.ne.s32.totalorder %s64, %s80
    %p82 = scmp.eq.s32.totalorder %s14, 0
    %p83 = por %p81, %p82
    %s84 = ssub.s32 %s15, %s27
    %s85 = ssub.s32 %s16, %s23
    %s86 = sor.u32 %s84, %s85
    %p87 = scmp.eq.s32.totalorder %s86, 0
    %s89 = sadd.s32 %s88, 1
    %s90 = scalar_select %p87, %s88, %s89
    %p93 = pneg %p87
    %p94 = scmp.eq.s32.totalorder %s8, 1
    %p95 = por %p93, %p94
    %p96 = scmp.ne.s32.totalorder %s88, %s91
    %p97 = scmp.eq.s32.totalorder %s8, 0
    %p98 = por %p96, %p97
    %p99 = scmp.ne.s32.totalorder %s88, %s91
    %p100 = scmp.eq.s32.totalorder %s13, 1
    %p101 = por %p99, %p100
    %p102 = scmp.ne.s32.totalorder %s91, %s92
    %p103 = scmp.eq.s32.totalorder %s13, 0
    %p104 = por %p102, %p103
    %p105 = scmp.ne.s32.totalorder %s91, %s92
    %p106 = scmp.eq.s32.totalorder %s14, 1
    %p107 = por %p105, %p106
    %p109 = scmp.ne.s32.totalorder %s92, %s108
    %p110 = scmp.eq.s32.totalorder %s14, 0
    %p111 = por %p109, %p110
    %p112 = scmp.le.s32.totalorder 1, %s8
    %p113 = scmp.lt.s32.totalorder %s8, 3
    %p114 = pnand %p112, %p113
    %p115 = pneg %p114
    // Predicated region
    $region9: #{dense_lateral_forward.1} parent=5 // pred_check
      _
    $region10: #{dense_lateral_forward.1} parent=5 // pred_check_branch
      %117 = sbr.rel (%p114) target = $region12
    $region11: #{dense_lateral_forward.1} parent=5 // pred_region
      %s118 = ssub.s32 %s8, 1
    $region12: #{dense_lateral_forward.1} parent=5 // pred_fallthru
      _
    %p119 = scmp.lt.s32.totalorder %s8, 2
    // Predicated region
    $region13: #{dense_lateral_forward.1} parent=5 // pred_check
      %p120 = pneg %p119
    $region14: #{dense_lateral_forward.1} parent=5 // pred_check_branch
      %122 = sbr.rel (%p120) target = $region16
    $region15: #{dense_lateral_forward.1} parent=5 // pred_region
      // Predicated region
      $region17: #{dense_lateral_forward.1} parent=15 // pred_check
        %p123 = pneg %p42
      $region18: #{dense_lateral_forward.1} parent=15 // pred_check_branch
        %125 = sbr.rel (%p123) target = $region20
      $region19: #{dense_lateral_forward.1} parent=15 // pred_region
        %s126 = smul.u32 32, %s16
        %p127 = scmp.lt.s32.totalorder %s15, 1
        %s128 = scalar_select %p127, %s15, 1
        %p129 = scmp.lt.s32.totalorder %s126, 31
        %s130 = scalar_select %p129, %s126, 31
        %s131 = smul.addr %s128, 32
        %s132 = sadd.s32 %s130, %s131
        %s133 = smul.addr %s132, 8
        %s134 = scalar_lea.vmem %s0, %s133
        %s135 = smul.u32 32, %s16
      $region20: #{dense_lateral_forward.1} parent=15 // pred_fallthru
        _
      // Predicated region
      $region21: #{dense_lateral_forward.1} parent=15 // pred_check
        %p136 = pneg %p70
      $region22: #{dense_lateral_forward.1} parent=15 // pred_check_branch
        %138 = sbr.rel (%p136) target = $region24
      $region23: #{dense_lateral_forward.1} parent=15 // pred_region
        %s139 = smul.u32 32, %s16
        %p140 = scmp.lt.s32.totalorder %s15, 1
        %s141 = scalar_select %p140, %s15, 1
        %p142 = scmp.lt.s32.totalorder %s139, 31
        %s143 = scalar_select %p142, %s139, 31
        %s144 = smul.addr %s141, 32
        %s145 = sadd.s32 %s143, %s144
        %s146 = smul.addr %s145, 8
        %s147 = scalar_lea.vmem %s1, %s146
        %s148 = smul.u32 32, %s16
      $region24: #{dense_lateral_forward.1} parent=15 // pred_fallthru
        _
    $region16: #{dense_lateral_forward.1} parent=5 // pred_fallthru
      _
    %p149 = scmp.le.s32.totalorder 1, %s8
    %p150 = scmp.lt.s32.totalorder %s8, 3
    %p151 = pnand %p149, %p150
    %p152 = pneg %p151
    // Predicated region
    $region25: #{dense_lateral_forward.1} parent=5 // pred_check
      _
    $region26: #{dense_lateral_forward.1} parent=5 // pred_check_branch
      %154 = sbr.rel (%p151) target = $region28
    $region27: #{dense_lateral_forward.1} parent=5 // pred_region
      %s155 = ssub.s32 %s8, 1
      %s156 = smul.u32 32, %s18
      %p157 = scmp.lt.s32.totalorder %s17, 1
      %s158 = scalar_select %p157, %s17, 1
      %p159 = scmp.lt.s32.totalorder %s156, 31
      %s160 = scalar_select %p159, %s156, 31
      %s161 = smul.addr %s158, 32
      %s162 = sadd.s32 %s160, %s161
      %s163 = smul.addr %s162, 8
      %s164 = scalar_lea.vmem %s0, %s163
      %p165 = pneg %p48
      %p166 = pneg %p45
      %s167 = smul.u32 32, %s18
      %p168 = scmp.lt.s32.totalorder %s17, 1
      %s169 = scalar_select %p168, %s17, 1
      %p170 = scmp.lt.s32.totalorder %s167, 31
      %s171 = scalar_select %p170, %s167, 31
      %s172 = smul.addr %s169, 32
      %s173 = sadd.s32 %s171, %s172
      %s174 = smul.addr %s173, 8
      %s175 = scalar_lea.vmem %s1, %s174
      %p176 = pneg %p76
      %p177 = pneg %p73
      %p178 = pneg %p104
      %p179 = pneg %p101
      %s180 = smul.u32 32, %s18
      %p181 = scmp.lt.s32.totalorder %s17, 1
      %s182 = scalar_select %p181, %s17, 1
      %p183 = scmp.lt.s32.totalorder %s180, 31
      %s184 = scalar_select %p183, %s180, 31
      %s185 = smul.addr %s182, 64
      %s186 = sadd.s32 %s184, %s185
      %s187 = smul.addr %s186, 8
      %s188 = scalar_lea.vmem %s2, %s187
      %s189 = smul.u32 32, %s18
      %p190 = scmp.lt.s32.totalorder %s17, 1
      %s191 = scalar_select %p190, %s17, 1
      %p192 = scmp.lt.s32.totalorder %s189, 31
      %s193 = scalar_select %p192, %s189, 31
      %s194 = smul.addr %s191, 32
      %s195 = sadd.s32 %s193, %s194
      %s196 = smul.addr %s195, 8
      %s197 = scalar_lea.vmem %s0, %s196
      %s198 = smul.u32 32, %s18
      %s199 = smul.u32 32, %s18
      %p200 = scmp.lt.s32.totalorder %s17, 1
      %s201 = scalar_select %p200, %s17, 1
      %p202 = scmp.lt.s32.totalorder %s199, 31
      %s203 = scalar_select %p202, %s199, 31
      %s204 = smul.addr %s201, 32
      %s205 = sadd.s32 %s203, %s204
      %s206 = smul.addr %s205, 8
      %s207 = scalar_lea.vmem %s1, %s206
      %s208 = smul.u32 32, %s18
      %s209 = smul.u32 32, %s18
      %p210 = scmp.lt.s32.totalorder %s17, 1
      %s211 = scalar_select %p210, %s17, 1
      %p212 = scmp.lt.s32.totalorder %s209, 31
      %s213 = scalar_select %p212, %s209, 31
      %s214 = smul.addr %s211, 64
      %s215 = sadd.s32 %s213, %s214
      %s216 = smul.addr %s215, 8
      %s217 = scalar_lea.vmem %s2, %s216
      %s218 = smul.u32 32, %s18
      %v219 = vld [vmem:[%s197] sm:$0xff]
      %v220 = vld [vmem:[%s197 + $0x8] sm:$0xff]
      %v221 = vld [vmem:[%s197 + $0x10] sm:$0xff]
      %v222 = vld [vmem:[%s197 + $0x18] sm:$0xff]
      %v223 = vld [vmem:[%s197 + $0x20] sm:$0xff]
      %v224 = vld [vmem:[%s197 + $0x28] sm:$0xff]
      %v225 = vld [vmem:[%s197 + $0x30] sm:$0xff]
      %v226 = vld [vmem:[%s197 + $0x38] sm:$0xff]
      %v227 = vld [vmem:[%s197 + $0x40] sm:$0xff]
      %v228 = vld [vmem:[%s197 + $0x48] sm:$0xff]
      %v229 = vld [vmem:[%s197 + $0x50] sm:$0xff]
      %v230 = vld [vmem:[%s197 + $0x58] sm:$0xff]
      %v231 = vld [vmem:[%s197 + $0x60] sm:$0xff]
      %v232 = vld [vmem:[%s197 + $0x68] sm:$0xff]
      %v233 = vld [vmem:[%s197 + $0x70] sm:$0xff]
      %v234 = vld [vmem:[%s197 + $0x78] sm:$0xff]
      %v235 = vld [vmem:[%s197 + $0x80] sm:$0xff]
      %v236 = vld [vmem:[%s197 + $0x88] sm:$0xff]
      %v237 = vld [vmem:[%s197 + $0x90] sm:$0xff]
      %v238 = vld [vmem:[%s197 + $0x98] sm:$0xff]
      %v239 = vld [vmem:[%s197 + $0xa0] sm:$0xff]
      %v240 = vld [vmem:[%s197 + $0xa8] sm:$0xff]
      %v241 = vld [vmem:[%s197 + $0xb0] sm:$0xff]
      %v242 = vld [vmem:[%s197 + $0xb8] sm:$0xff]
      %v243 = vld [vmem:[%s197 + $0xc0] sm:$0xff]
      %v244 = vld [vmem:[%s197 + $0xc8] sm:$0xff]
      %v245 = vld [vmem:[%s197 + $0xd0] sm:$0xff]
      %v246 = vld [vmem:[%s197 + $0xd8] sm:$0xff]
      %v247 = vld [vmem:[%s197 + $0xe0] sm:$0xff]
      %v248 = vld [vmem:[%s197 + $0xe8] sm:$0xff]
      %v249 = vld [vmem:[%s197 + $0xf0] sm:$0xff]
      %v250 = vld [vmem:[%s197 + $0xf8] sm:$0xff]
      %v251 = vld [vmem:[%s207] sm:$0xff]
      %v252 = vld [vmem:[%s207 + $0x8] sm:$0xff]
      %v253 = vld [vmem:[%s207 + $0x10] sm:$0xff]
      %v254 = vld [vmem:[%s207 + $0x18] sm:$0xff]
      %v255 = vld [vmem:[%s207 + $0x20] sm:$0xff]
      %v256 = vld [vmem:[%s207 + $0x28] sm:$0xff]
      %v257 = vld [vmem:[%s207 + $0x30] sm:$0xff]
      %v258 = vld [vmem:[%s207 + $0x38] sm:$0xff]
      %v259 = vld [vmem:[%s207 + $0x40] sm:$0xff]
      %v260 = vld [vmem:[%s207 + $0x48] sm:$0xff]
      %v261 = vld [vmem:[%s207 + $0x50] sm:$0xff]
      %v262 = vld [vmem:[%s207 + $0x58] sm:$0xff]
      %v263 = vld [vmem:[%s207 + $0x60] sm:$0xff]
      %v264 = vld [vmem:[%s207 + $0x68] sm:$0xff]
      %v265 = vld [vmem:[%s207 + $0x70] sm:$0xff]
      %v266 = vld [vmem:[%s207 + $0x78] sm:$0xff]
      %v267 = vld [vmem:[%s207 + $0x80] sm:$0xff]
      %v268 = vld [vmem:[%s207 + $0x88] sm:$0xff]
      %v269 = vld [vmem:[%s207 + $0x90] sm:$0xff]
      %v270 = vld [vmem:[%s207 + $0x98] sm:$0xff]
      %v271 = vld [vmem:[%s207 + $0xa0] sm:$0xff]
      %v272 = vld [vmem:[%s207 + $0xa8] sm:$0xff]
      %v273 = vld [vmem:[%s207 + $0xb0] sm:$0xff]
      %v274 = vld [vmem:[%s207 + $0xb8] sm:$0xff]
      %v275 = vld [vmem:[%s207 + $0xc0] sm:$0xff]
      %v276 = vld [vmem:[%s207 + $0xc8] sm:$0xff]
      %v277 = vld [vmem:[%s207 + $0xd0] sm:$0xff]
      %v278 = vld [vmem:[%s207 + $0xd8] sm:$0xff]
      %v279 = vld [vmem:[%s207 + $0xe0] sm:$0xff]
      %v280 = vld [vmem:[%s207 + $0xe8] sm:$0xff]
      %v281 = vld [vmem:[%s207 + $0xf0] sm:$0xff]
      %v282 = vld [vmem:[%s207 + $0xf8] sm:$0xff]
      %283 = vst [vmem:[%s217] sm:$0xff] %v219
      %284 = vst [vmem:[%s217 + $0x8] sm:$0xff] %v220
      %285 = vst [vmem:[%s217 + $0x10] sm:$0xff] %v221
      %286 = vst [vmem:[%s217 + $0x18] sm:$0xff] %v222
      %287 = vst [vmem:[%s217 + $0x20] sm:$0xff] %v223
      %288 = vst [vmem:[%s217 + $0x28] sm:$0xff] %v224
      %289 = vst [vmem:[%s217 + $0x30] sm:$0xff] %v225
      %290 = vst [vmem:[%s217 + $0x38] sm:$0xff] %v226
      %291 = vst [vmem:[%s217 + $0x40] sm:$0xff] %v227
      %292 = vst [vmem:[%s217 + $0x48] sm:$0xff] %v228
      %293 = vst [vmem:[%s217 + $0x50] sm:$0xff] %v229
      %294 = vst [vmem:[%s217 + $0x58] sm:$0xff] %v230
      %295 = vst [vmem:[%s217 + $0x60] sm:$0xff] %v231
      %296 = vst [vmem:[%s217 + $0x68] sm:$0xff] %v232
      %297 = vst [vmem:[%s217 + $0x70] sm:$0xff] %v233
      %298 = vst [vmem:[%s217 + $0x78] sm:$0xff] %v234
      %299 = vst [vmem:[%s217 + $0x80] sm:$0xff] %v235
      %300 = vst [vmem:[%s217 + $0x88] sm:$0xff] %v236
      %301 = vst [vmem:[%s217 + $0x90] sm:$0xff] %v237
      %302 = vst [vmem:[%s217 + $0x98] sm:$0xff] %v238
      %303 = vst [vmem:[%s217 + $0xa0] sm:$0xff] %v239
      %304 = vst [vmem:[%s217 + $0xa8] sm:$0xff] %v240
      %305 = vst [vmem:[%s217 + $0xb0] sm:$0xff] %v241
      %306 = vst [vmem:[%s217 + $0xb8] sm:$0xff] %v242
      %307 = vst [vmem:[%s217 + $0xc0] sm:$0xff] %v243
      %308 = vst [vmem:[%s217 + $0xc8] sm:$0xff] %v244
      %309 = vst [vmem:[%s217 + $0xd0] sm:$0xff] %v245
      %310 = vst [vmem:[%s217 + $0xd8] sm:$0xff] %v246
      %311 = vst [vmem:[%s217 + $0xe0] sm:$0xff] %v247
      %312 = vst [vmem:[%s217 + $0xe8] sm:$0xff] %v248
      %313 = vst [vmem:[%s217 + $0xf0] sm:$0xff] %v249
      %314 = vst [vmem:[%s217 + $0xf8] sm:$0xff] %v250
      %315 = vst [vmem:[%s217 + $0x100] sm:$0xff] %v251
      %316 = vst [vmem:[%s217 + $0x108] sm:$0xff] %v252
      %317 = vst [vmem:[%s217 + $0x110] sm:$0xff] %v253
      %318 = vst [vmem:[%s217 + $0x118] sm:$0xff] %v254
      %319 = vst [vmem:[%s217 + $0x120] sm:$0xff] %v255
      %320 = vst [vmem:[%s217 + $0x128] sm:$0xff] %v256
      %321 = vst [vmem:[%s217 + $0x130] sm:$0xff] %v257
      %322 = vst [vmem:[%s217 + $0x138] sm:$0xff] %v258
      %323 = vst [vmem:[%s217 + $0x140] sm:$0xff] %v259
      %324 = vst [vmem:[%s217 + $0x148] sm:$0xff] %v260
      %325 = vst [vmem:[%s217 + $0x150] sm:$0xff] %v261
      %326 = vst [vmem:[%s217 + $0x158] sm:$0xff] %v262
      %327 = vst [vmem:[%s217 + $0x160] sm:$0xff] %v263
      %328 = vst [vmem:[%s217 + $0x168] sm:$0xff] %v264
      %329 = vst [vmem:[%s217 + $0x170] sm:$0xff] %v265
      %330 = vst [vmem:[%s217 + $0x178] sm:$0xff] %v266
      %331 = vst [vmem:[%s217 + $0x180] sm:$0xff] %v267
      %332 = vst [vmem:[%s217 + $0x188] sm:$0xff] %v268
      %333 = vst [vmem:[%s217 + $0x190] sm:$0xff] %v269
      %334 = vst [vmem:[%s217 + $0x198] sm:$0xff] %v270
      %335 = vst [vmem:[%s217 + $0x1a0] sm:$0xff] %v271
      %336 = vst [vmem:[%s217 + $0x1a8] sm:$0xff] %v272
      %337 = vst [vmem:[%s217 + $0x1b0] sm:$0xff] %v273
      %338 = vst [vmem:[%s217 + $0x1b8] sm:$0xff] %v274
      %339 = vst [vmem:[%s217 + $0x1c0] sm:$0xff] %v275
      %340 = vst [vmem:[%s217 + $0x1c8] sm:$0xff] %v276
      %341 = vst [vmem:[%s217 + $0x1d0] sm:$0xff] %v277
      %342 = vst [vmem:[%s217 + $0x1d8] sm:$0xff] %v278
      %343 = vst [vmem:[%s217 + $0x1e0] sm:$0xff] %v279
      %344 = vst [vmem:[%s217 + $0x1e8] sm:$0xff] %v280
      %345 = vst [vmem:[%s217 + $0x1f0] sm:$0xff] %v281
      %346 = vst [vmem:[%s217 + $0x1f8] sm:$0xff] %v282
      %s347 = smul.u32 32, %s18
      %p348 = scmp.lt.s32.totalorder %s17, 1
      %s349 = scalar_select %p348, %s17, 1
      %p350 = scmp.lt.s32.totalorder %s347, 31
      %s351 = scalar_select %p350, %s347, 31
      %s352 = smul.addr %s349, 64
      %s353 = sadd.s32 %s351, %s352
      %s354 = smul.addr %s353, 8
      %s355 = scalar_lea.vmem %s2, %s354
      // Predicated region
      $region29: #{dense_lateral_forward.1} parent=27 // pred_check
        %p356 = pneg %p101
      $region30: #{dense_lateral_forward.1} parent=27 // pred_check_branch
        %358 = sbr.rel (%p356) target = $region32
      $region31: #{dense_lateral_forward.1} parent=27 // pred_region
        %s359 = smul.u32 32, %s18
      $region32: #{dense_lateral_forward.1} parent=27 // pred_fallthru
        _
    $region28: #{dense_lateral_forward.1} parent=5 // pred_fallthru
      _
    %p360 = scmp.le.s32.totalorder 2, %s8
    // Predicated region
    $region33: #{dense_lateral_forward.1} parent=5 // pred_check
      %p361 = pneg %p360
    $region34: #{dense_lateral_forward.1} parent=5 // pred_check_branch
      %363 = sbr.rel (%p361) target = $region36
    $region35: #{dense_lateral_forward.1} parent=5 // pred_region
      %s364 = ssub.s32 %s8, 2
      // Predicated region
      $region37: #{dense_lateral_forward.1} parent=35 // pred_check
        %p365 = pneg %p107
      $region38: #{dense_lateral_forward.1} parent=35 // pred_check_branch
        %367 = sbr.rel (%p365) target = $region40
      $region39: #{dense_lateral_forward.1} parent=35 // pred_region
        %s368 = smul.u32 32, %s20
        %p369 = scmp.lt.s32.totalorder %s19, 1
        %s370 = scalar_select %p369, %s19, 1
        %p371 = scmp.lt.s32.totalorder %s368, 31
        %s372 = scalar_select %p371, %s368, 31
        %s373 = smul.addr %s370, 64
        %s374 = sadd.s32 %s372, %s373
        %s375 = smul.addr %s374, 8
        %s376 = scalar_lea.vmem %s2, %s375
      $region40: #{dense_lateral_forward.1} parent=35 // pred_fallthru
        _
    $region36: #{dense_lateral_forward.1} parent=5 // pred_fallthru
      _
  $region6: #{dense_lateral_forward.1} parent=0 // loop_footer
    %s12 = sadd.s32 1, %s8
  $region7: #{dense_lateral_forward.1} parent=0 // loop_footer_branch
    %7 = sbr.rel target = $region3
  $region8: #{dense_lateral_forward.1} parent=0 // loop_exit
    _

</llo_original>
